<compile_context>
chip_gen: v7x
topology: tpu7x:2x2x1
jax: 0.10.0
libtpu: 0.0.40
codegen_flags: <defaults>
</compile_context>

<pallas_src>
import jax
import jax.numpy as jnp
from jax.experimental import pallas as pl
from jax.experimental.pallas import tpu as pltpu


def _cdiv(a, b):
    return -(-a // b)


def _round_up(x, m):
    return (x + m - 1) // m * m


def _fold_factor(C, D, target_rows):
    """Smallest divisor f of D such that C*f >= target_rows (sublane packing)."""
    if C >= target_rows:
        return 1
    best = 1
    for f in range(1, D + 1):
        if D % f == 0:
            best = f
            if C * f >= target_rows:
                return f
    return best


def _choose_lane_tile(rows, lanes, itemsize, max_block_bytes):
    """Lane tile: multiple of 128, as large as the per-block byte budget allows."""
    cap = max(128, (max_block_bytes // max(rows * itemsize, 1)) // 128 * 128)
    return int(min(_round_up(lanes, 128), cap))


def _vmem_limit_bytes():
    """~75% of physical VMEM (128 MiB on v5e/v6e -> 96 MiB; 64 MiB on v7x -> 48 MiB)."""
    try:
        phys = int(pltpu.get_tpu_info().vmem_capacity_bytes)
    except Exception:
        phys = 64 * 1024 * 1024
    return int(max(16 * 1024 * 1024, min(phys * 3 // 4, 96 * 1024 * 1024)))


# --------------------------- fused read-once path ---------------------------

def _se_gating_fused(x2, w32, b32, N, C, D, H, W, f, R, S_r, S, vmem_limit):
    dtype = x2.dtype
    itemsize = jnp.dtype(dtype).itemsize
    # Row-expanded excitation: Wf[r, r'] = w[r//f, r'//f] / S ; b_rows[r] = b[r//f].
    w_fold = jnp.repeat(jnp.repeat(w32, f, axis=0), f, axis=1) * (1.0 / S)   # (R, R) f32
    b_rows = jnp.repeat(b32, f, axis=0).reshape(R, 1)                         # (R, 1) f32

    def kernel(x_ref, w_ref, b_ref, o_ref):
        xs = x_ref[0]                                                        # (R, S_r)
        ssum = jnp.sum(xs.astype(jnp.float32), axis=-1, keepdims=True)       # (R, 1) f32
        # Exact (R,1) -> (1,R) move of the pooled column: one-hot select + sublane
        # reduce.  Pure VPU/XLU, exact f32 (no MXU rounding, no vector.transpose).
        rows = jax.lax.broadcasted_iota(jnp.int32, (R, R), 0)
        cols = jax.lax.broadcasted_iota(jnp.int32, (R, R), 1)
        pooled_lanes = jnp.sum(
            jnp.where(rows == cols, jnp.broadcast_to(ssum, (R, R)), 0.0),
            axis=0, keepdims=True)                                           # (1, R) f32
        logits = jnp.sum(w_ref[...] * pooled_lanes, axis=-1, keepdims=True) + b_ref[...]
        gate = jax.nn.sigmoid(logits)                                        # (R, 1) f32
        # Multiply in the input dtype (matches PyTorch: conv output has x's dtype).
        o_ref[0] = (xs * gate.astype(xs.dtype)).astype(o_ref.dtype)

    out = pl.pallas_call(
        kernel,
        out_shape=jax.ShapeDtypeStruct((N, R, S_r), dtype),
        grid=(N,),
        in_specs=[
            pl.BlockSpec((1, R, S_r), lambda n: (n, 0, 0)),
            pl.BlockSpec((R, R), lambda n: (0, 0)),
            pl.BlockSpec((R, 1), lambda n: (0, 0)),
        ],
        out_specs=pl.BlockSpec((1, R, S_r), lambda n: (n, 0, 0)),
        compiler_params=pltpu.CompilerParams(
            dimension_semantics=("parallel",),
            vmem_limit_bytes=vmem_limit),
        cost_estimate=pl.CostEstimate(
            flops=2 * N * R * S_r + 3 * N * R * R,
            transcendentals=N * R,
            bytes_accessed=2 * N * R * S_r * itemsize),
    )(x2, w_fold, b_rows)
    return out.reshape(N, C, D, H, W)


# ------------------------------ tiled path -----------------------------------

def _se_gating_tiled(x2, w32, b32, N, C, D, H, W, f, R, S_r, S,
                     itemsize, max_block_bytes, vmem_limit):
    dtype = x2.dtype
    ts = _choose_lane_tile(R, S_r, itemsize, max_block_bytes)
    n_s = _cdiv(S_r, ts)

    # When N == 1 the only parallel work in pass 1 would be a single program; split the
    # S-tile range in half so both v7x TensorCores participate.  On single-TC chips the
    # extra leading axis is just a serial loop over two tiny partial accumulators.
    n_split = 2 if (N == 1 and n_s >= 2) else 1
    tiles_per_split = _cdiv(n_s, n_split)
    overshoot = n_split * tiles_per_split > n_s          # ghost tile on the last split
    need_mask = (S_r % ts != 0) or overshoot             # ragged last tile and/or ghost

    if overshoot:
        def x_index_p1(p, n, s):
            return (n, 0, jnp.minimum(p * tiles_per_split + s, n_s - 1))
    else:
        def x_index_p1(p, n, s):
            return (n, 0, p * tiles_per_split + s)

    # ---- Pass 1: tiled spatial sum with resident f32 accumulator (no pad/slice). ----
    def pool_sum_kernel(x_ref, sum_ref):
        s = pl.program_id(2)

        @pl.when(s == 0)
        def _():
            sum_ref[...] = jnp.zeros_like(sum_ref)

        xt = x_ref[0].astype(jnp.float32)                                   # (R, ts)
        if need_mask:
            t = pl.program_id(0) * tiles_per_split + s                      # logical tile
            lane = jax.lax.broadcasted_iota(jnp.int32, (R, ts), 1) + t * ts
            xt = jnp.where(lane < S_r, xt, 0.0)
        sum_ref[0, 0] += jnp.sum(xt, axis=-1, keepdims=True)

    row_sums = pl.pallas_call(
        pool_sum_kernel,
        out_shape=jax.ShapeDtypeStruct((n_split, N, R, 1), jnp.float32),
        grid=(n_split, N, tiles_per_split),
        in_specs=[pl.BlockSpec((1, R, ts), x_index_p1)],
        out_specs=pl.BlockSpec((1, 1, R, 1), lambda p, n, s: (p, n, 0, 0)),
        compiler_params=pltpu.CompilerParams(
            dimension_semantics=("parallel", "parallel", "arbitrary"),
            vmem_limit_bytes=vmem_limit),
        cost_estimate=pl.CostEstimate(
            flops=N * R * S_r,
            transcendentals=0,
            bytes_accessed=N * R * S_r * itemsize + n_split * N * R * 4),
    )(x2)

    # ---- Excitation (hoisted out of the streaming kernels, batched over N). ----
    pooled = row_sums.sum(axis=0).reshape(N, C, f).sum(axis=-1) * (1.0 / S)   # (N, C) f32
    gate = jax.nn.sigmoid(pooled @ w32.T + b32[None, :])                      # (N, C) f32
    gate_rows = jnp.repeat(gate, f, axis=1).astype(dtype).reshape(N, R, 1)

    # ---- Pass 2: streamed broadcast multiply in the input dtype (no pad/slice;
    #      out-of-bounds tail writes of the last partial block are dropped by Pallas). ----
    def scale_kernel(x_ref, g_ref, o_ref):
        o_ref[0] = (x_ref[0] * g_ref[0]).astype(o_ref.dtype)

    out = pl.pallas_call(
        scale_kernel,
        out_shape=jax.ShapeDtypeStruct((N, R, S_r), dtype),
        grid=(N, n_s),
        in_specs=[
            pl.BlockSpec((1, R, ts), lambda n, s: (n, 0, s)),
            pl.BlockSpec((1, R, 1), lambda n, s: (n, 0, 0)),
        ],
        out_specs=pl.BlockSpec((1, R, ts), lambda n, s: (n, 0, s)),
        compiler_params=pltpu.CompilerParams(
            dimension_semantics=("parallel", "parallel"),
            vmem_limit_bytes=vmem_limit),
        cost_estimate=pl.CostEstimate(
            flops=N * R * S_r,
            transcendentals=0,
            bytes_accessed=2 * N * R * S_r * itemsize),
    )(x2, gate_rows)

    return out.reshape(N, C, D, H, W)


# ------------------------------- entry point --------------------------------

def se_gating(x, w, b, *, allow_fused=True, max_block_bytes=None, vmem_limit_bytes=None):
    """x: (N, C, D, H, W); w: (C, C) or (C, C, 1, 1, 1) Conv3d weight; b: (C,)."""
    N, C, D, H, W = x.shape
    S = D * H * W
    itemsize = jnp.dtype(x.dtype).itemsize

    vmem_limit = int(vmem_limit_bytes) if vmem_limit_bytes else _vmem_limit_bytes()
    if max_block_bytes is None:
        max_block_bytes = min(8 * 1024 * 1024, max(vmem_limit // 8, 512 * 1024))

    # Dtype-aware sublane fold: rows >= 8 (f32) / 16 (bf16) / 32 (int8, fp8).
    target_rows = max(8, 32 // itemsize)
    f = _fold_factor(C, D, target_rows)
    R = C * f
    S_r = S // f

    x2 = x.reshape(N, R, S_r)
    w32 = w.astype(jnp.float32).reshape(C, C)
    b32 = b.astype(jnp.float32).reshape(C)

    # Fused read-once path when a sample's working set (double-buffered in/out blocks,
    # the f32 cast temp, and the tiny R x R excitation temporaries) fits the VMEM budget.
    slab_in = R * S_r * itemsize
    fused_need = 5 * slab_in + R * S_r * 4 + 8 * R * R * 4 + 2 * 1024 * 1024
    if allow_fused and fused_need <= vmem_limit:
        return _se_gating_fused(x2, w32, b32, N, C, D, H, W, f, R, S_r, S, vmem_limit)
    return _se_gating_tiled(x2, w32, b32, N, C, D, H, W, f, R, S_r, S,
                            itemsize, max_block_bytes, vmem_limit)


def se_gating_ref(x, w, b):
    """Pure-JAX reference mirroring the PyTorch forward."""
    w32 = w.astype(jnp.float32).reshape(x.shape[1], x.shape[1])
    b32 = b.astype(jnp.float32).reshape(x.shape[1])
    pooled = jnp.mean(x.astype(jnp.float32), axis=(2, 3, 4))          # (N, C)
    gate = jax.nn.sigmoid(pooled @ w32.T + b32[None, :])              # (N, C) f32
    return x * gate.astype(x.dtype)[:, :, None, None, None]


def _run_case(key, shape, dtype=jnp.float32, tol=1e-5, **kwargs):
    N, C, D, H, W = shape
    k_x, k_w, k_b = jax.random.split(key, 3)
    x = jax.random.normal(k_x, shape, dtype=jnp.float32).astype(dtype)
    # Deterministic synthetic Conv3d(C, C, kernel_size=1, bias=True) parameters.
    bound = 1.0 / (C ** 0.5)
    w = jax.random.uniform(k_w, (C, C), dtype=jnp.float32, minval=-bound, maxval=bound)
    b = jax.random.uniform(k_b, (C,), dtype=jnp.float32, minval=-bound, maxval=bound)

    out = jax.block_until_ready(se_gating(x, w, b, **kwargs))
    ref = se_gating_ref(x, w, b)
    assert out.shape == ref.shape == shape
    assert out.dtype == x.dtype
    ok = jnp.allclose(out.astype(jnp.float32), ref.astype(jnp.float32), atol=tol, rtol=tol)
    assert ok, f"mismatch for shape {shape} dtype {dtype}"


if __name__ == "__main__":
    key = jax.random.PRNGKey(0)
    ks = jax.random.split(key, 6)

    # Fused read-once path (per-sample slab fits VMEM), f32 fold 4 -> 8 rows.
    _run_case(ks[0], (2, 4, 4, 8, 8))
    # Forced tiled path: several lane tiles, resident f32 accumulator in pass 1.
    _run_case(ks[1], (2, 4, 4, 16, 16), allow_fused=False, max_block_bytes=4096)
    # Tiled, N=1: 2-way split of the reduction across TCs + ragged last tile (masked)
    # + clamped ghost tile on the second split.
    _run_case(ks[2], (1, 4, 4, 10, 14), allow_fused=False, max_block_bytes=4096)
    # C >= 8 (no fold), ragged spatial extent, fused path (full-dim block, no padding).
    _run_case(ks[3], (1, 8, 2, 5, 7))
    # bf16: dtype-aware fold (rows = 16), fused path.
    _run_case(ks[4], (2, 4, 4, 8, 8), dtype=jnp.bfloat16, tol=2e-2)
    # bf16 tiled path.
    _run_case(ks[5], (2, 4, 4, 16, 16), dtype=jnp.bfloat16, tol=2e-2,
              allow_fused=False, max_block_bytes=4096)

    print("KERNEL_OK")
</pallas_src>

<mosaic_0001>
module attributes {stable_mosaic.version = 11 : i64} {
  func.func @kernel(%arg0: i32, %arg1: memref<1x8x128xf32, #tpu.memory_space<vmem>>, %arg2: memref<8x8xf32, #tpu.memory_space<vmem>>, %arg3: memref<8x1xf32, #tpu.memory_space<vmem>>, %arg4: memref<1x8x128xf32, #tpu.memory_space<vmem>>) attributes {dimension_semantics = [#tpu.dimension_semantics<parallel>], iteration_bounds = array<i64: 2>, scalar_prefetch = 0 : i64, scratch_operands = 0 : i64, tpu.core_type = #tpu.core_type<tc>, window_params = [{transform_indices = @transform_0, window_bounds = array<i64: 1, 8, 128>}, {pipeline_mode = #tpu.pipeline_mode<synchronous>, transform_indices = @transform_1, window_bounds = array<i64: 8, 8>}, {pipeline_mode = #tpu.pipeline_mode<synchronous>, transform_indices = @transform_2, window_bounds = array<i64: 8, 1>}, {transform_indices = @transform_3, window_bounds = array<i64: 1, 8, 128>}]} {
    %c0 = arith.constant 0 : index
    %c0_0 = arith.constant 0 : index
    %c0_1 = arith.constant 0 : index
    %0 = vector.load %arg1[%c0, %c0_0, %c0_1] : memref<1x8x128xf32, #tpu.memory_space<vmem>>, vector<1x8x128xf32>
    %1 = vector.shape_cast %0 : vector<1x8x128xf32> to vector<8x128xf32>
    %cst = arith.constant dense<0.000000e+00> : vector<8xf32>
    %2 = vector.multi_reduction <add>, %1, %cst [1] : vector<8x128xf32> to vector<8xf32>
    %3 = vector.shape_cast %2 : vector<8xf32> to vector<8x1xf32>
    %4 = tpu.iota {dimensions = array<i32: 0>} : vector<8x8xi32>
    %5 = tpu.iota {dimensions = array<i32: 1>} : vector<8x8xi32>
    %6 = arith.cmpi eq, %4, %5 : vector<8x8xi32>
    %7 = vector.shape_cast %3 : vector<8x1xf32> to vector<8x1xf32>
    %8 = vector.broadcast %7 : vector<8x1xf32> to vector<8x8xf32>
    %cst_2 = arith.constant 0.000000e+00 : f32
    %9 = vector.broadcast %cst_2 : f32 to vector<8x8xf32>
    %10 = arith.select %6, %8, %9 : vector<8x8xi1>, vector<8x8xf32>
    %cst_3 = arith.constant dense<0.000000e+00> : vector<8xf32>
    %11 = vector.multi_reduction <add>, %10, %cst_3 [0] : vector<8x8xf32> to vector<8xf32>
    %12 = vector.shape_cast %11 : vector<8xf32> to vector<1x8xf32>
    %c0_4 = arith.constant 0 : index
    %c0_5 = arith.constant 0 : index
    %13 = vector.load %arg2[%c0_4, %c0_5] : memref<8x8xf32, #tpu.memory_space<vmem>>, vector<8x8xf32>
    %14 = vector.broadcast %12 : vector<1x8xf32> to vector<8x8xf32>
    %15 = arith.mulf %13, %14 : vector<8x8xf32>
    %cst_6 = arith.constant dense<0.000000e+00> : vector<8xf32>
    %16 = vector.multi_reduction <add>, %15, %cst_6 [1] : vector<8x8xf32> to vector<8xf32>
    %17 = vector.shape_cast %16 : vector<8xf32> to vector<8x1xf32>
    %c0_7 = arith.constant 0 : index
    %c0_8 = arith.constant 0 : index
    %18 = vector.load %arg3[%c0_7, %c0_8] : memref<8x1xf32, #tpu.memory_space<vmem>>, vector<8x1xf32>
    %19 = arith.addf %17, %18 : vector<8x1xf32>
    %20 = arith.negf %19 : vector<8x1xf32>
    %21 = math.exp %20 : vector<8x1xf32>
    %cst_9 = arith.constant 1.000000e+00 : f32
    %22 = vector.broadcast %cst_9 : f32 to vector<8x1xf32>
    %23 = arith.addf %22, %21 : vector<8x1xf32>
    %24 = arith.divf %22, %23 : vector<8x1xf32>
    %25 = vector.broadcast %24 : vector<8x1xf32> to vector<8x128xf32>
    %26 = arith.mulf %1, %25 : vector<8x128xf32>
    %c0_10 = arith.constant 0 : index
    %c0_11 = arith.constant 0 : index
    %c0_12 = arith.constant 0 : index
    %27 = vector.load %arg4[%c0_10, %c0_11, %c0_12] : memref<1x8x128xf32, #tpu.memory_space<vmem>>, vector<1x8x128xf32>
    %28 = vector.shape_cast %27 : vector<1x8x128xf32> to vector<8x128xf32>
    %29 = vector.shape_cast %26 : vector<8x128xf32> to vector<1x8x128xf32>
    tpu.vector_store %arg4[%c0_10, %c0_11, %c0_12], %29 {strides = array<i32>} : memref<1x8x128xf32, #tpu.memory_space<vmem>>, vector<1x8x128xf32>,
    return
  }
  func.func @transform_0(%arg0: i32) -> (i32, i32, i32) {
    %c0_i32 = arith.constant 0 : i32
    %c0_i32_0 = arith.constant 0 : i32
    %c0_i32_1 = arith.constant 0 : i32
    return %arg0, %c0_i32, %c0_i32_0 : i32, i32, i32
  }
  func.func @transform_1(%arg0: i32) -> (i32, i32) {
    %c0_i32 = arith.constant 0 : i32
    %c0_i32_0 = arith.constant 0 : i32
    %c0_i32_1 = arith.constant 0 : i32
    return %c0_i32, %c0_i32_0 : i32, i32
  }
  func.func @transform_2(%arg0: i32) -> (i32, i32) {
    %c0_i32 = arith.constant 0 : i32
    %c0_i32_0 = arith.constant 0 : i32
    %c0_i32_1 = arith.constant 0 : i32
    return %c0_i32, %c0_i32_0 : i32, i32
  }
  func.func @transform_3(%arg0: i32) -> (i32, i32, i32) {
    %c0_i32 = arith.constant 0 : i32
    %c0_i32_0 = arith.constant 0 : i32
    %c0_i32_1 = arith.constant 0 : i32
    return %arg0, %c0_i32, %c0_i32_0 : i32, i32, i32
  }
}

</mosaic_0001>

<llo_original>
// kernel: tpu_custom_call.1
$region0: #{tpu_custom_call.1}
  #allocation0 [shape = 'u32[]', space=smem, size = 0x4, offset = 0x4, fixed_abs, tag = 'smem constant byte address 0x4 - core index']
  #allocation1 [shape = 'u32[144,128]{1,0:T(1,128)}', space=vmem, size = 0x12000, scoped, tag = 'internal scratch']
  %s0 = inlined_call_operand.hbm [shape: f32[2,8,128], index: 0, kind: input, shape index: {}]
  %s1 = inlined_call_operand.vmem [shape: f32[8,8], index: 1, kind: input, shape index: {}]
  %s2 = inlined_call_operand.vmem [shape: f32[8,1], index: 2, kind: input, shape index: {}]
  %s3 = inlined_call_operand.hbm [shape: f32[2,8,128], index: 3, kind: output, shape index: {}]
  %s4 = sld [smem:[#allocation0]]
  $region49: #{tpu_custom_call.1} parent=0
    _
  %s6 = ssub.s32 1, %s4
  %s7 = scalar_select 0, %s6, %s4
  $region1: #{tpu_custom_call.1} parent=0
    #allocation2 [shape = 'u8[8192]{0}', space=vmem, size = 0x2000, scoped, tag = 'input window, operand 0']
    #allocation3 [shape = 's32[2]{0}', space=sflag, size = 0x8, scoped, tag = 'scoped memory for tpu_custom_call.1']
    #allocation4 [shape = 's32[2]{0}', space=sflag, size = 0x8, scoped, tag = 'scoped memory for tpu_custom_call.1']
    #allocation5 [shape = 'u8[8192]{0}', space=vmem, size = 0x2000, scoped, tag = 'output window, operand 0']
    %8 = vsyncpa [#allocation3], 0
    %s9 = scalar_lea.sflag [#allocation3], 1
    %10 = vsyncpa %s9, 0
    %11 = vsyncpa [#allocation4], 0
    %s12 = scalar_lea.sflag [#allocation4], 1
    %13 = vsyncpa %s12, 0
    loop: start=0, step=1, limit=4
    $region2: #{tpu_custom_call.1} parent=1 // loop_pre_header
      _
    $region3: #{tpu_custom_call.1} parent=1 // loop_header
      %s15 = sphi 0, %s19
      %p16 = scmp.ge.s32.totalorder %s15, 4
      %s25 = sphi 0, %s27
      %s28 = sphi 0, %s25
      %s29 = sphi 0, %s28
      %s45 = sphi 0, %s29
      %s49 = sphi 0, %s49
      %s51 = sphi 0, %s49
      %s52 = sphi 0, %s51
      %s66 = sphi 0, %s52
      %s70 = sphi 0, %s70
      %s72 = sphi 0, %s70
      %s73 = sphi 0, %s72
      %s87 = sphi 0, %s73
      %s93 = sphi 0, %s95
      %s96 = sphi 0, %s93
      %s97 = sphi 0, %s96
      %s113 = sphi 0, %s97
    $region4: #{tpu_custom_call.1} parent=1 // loop_header_branch
      %18 = sbr.rel (%p16) target = $region8
    $region5: #{tpu_custom_call.1} parent=1 // loop_body
      %s20 = ssub.s32 %s15, 1
      %s21 = ssub.s32 %s15, 2
      %s22 = sadd.s32 %s15, 1
      %s23 = ssub.s32 %s15, %s22
      %p24 = scmp.eq.s32.totalorder %s23, 0
      %s26 = sadd.s32 %s25, 1
      %s27 = scalar_select %p24, %s25, %s26
      %p30 = pneg %p24
      %p31 = scmp.eq.s32.totalorder %s15, 1
      %p32 = por %p30, %p31
      %p33 = scmp.ne.s32.totalorder %s25, %s28
      %p34 = scmp.eq.s32.totalorder %s15, 0
      %p35 = por %p33, %p34
      %p36 = scmp.ne.s32.totalorder %s25, %s28
      %p37 = scmp.eq.s32.totalorder %s20, 1
      %p38 = por %p36, %p37
      %p39 = scmp.ne.s32.totalorder %s28, %s29
      %p40 = scmp.eq.s32.totalorder %s20, 0
      %p41 = por %p39, %p40
      %p42 = scmp.ne.s32.totalorder %s28, %s29
      %p43 = scmp.eq.s32.totalorder %s21, 1
      %p44 = por %p42, %p43
      %p46 = scmp.ne.s32.totalorder %s29, %s45
      %p47 = scmp.eq.s32.totalorder %s21, 0
      %p48 = por %p46, %p47
      %s50 = sadd.s32 %s49, 1
      %p53 = scmp.eq.s32.totalorder %s15, 1
      %p54 = scmp.ne.s32.totalorder %s49, %s51
      %p55 = scmp.eq.s32.totalorder %s15, 0
      %p56 = por %p54, %p55
      %p57 = scmp.ne.s32.totalorder %s49, %s51
      %p58 = scmp.eq.s32.totalorder %s20, 1
      %p59 = por %p57, %p58
      %p60 = scmp.ne.s32.totalorder %s51, %s52
      %p61 = scmp.eq.s32.totalorder %s20, 0
      %p62 = por %p60, %p61
      %p63 = scmp.ne.s32.totalorder %s51, %s52
      %p64 = scmp.eq.s32.totalorder %s21, 1
      %p65 = por %p63, %p64
      %p67 = scmp.ne.s32.totalorder %s52, %s66
      %p68 = scmp.eq.s32.totalorder %s21, 0
      %p69 = por %p67, %p68
      %s71 = sadd.s32 %s70, 1
      %p74 = scmp.eq.s32.totalorder %s15, 1
      %p75 = scmp.ne.s32.totalorder %s70, %s72
      %p76 = scmp.eq.s32.totalorder %s15, 0
      %p77 = por %p75, %p76
      %p78 = scmp.ne.s32.totalorder %s70, %s72
      %p79 = scmp.eq.s32.totalorder %s20, 1
      %p80 = por %p78, %p79
      %p81 = scmp.ne.s32.totalorder %s72, %s73
      %p82 = scmp.eq.s32.totalorder %s20, 0
      %p83 = por %p81, %p82
      %p84 = scmp.ne.s32.totalorder %s72, %s73
      %p85 = scmp.eq.s32.totalorder %s21, 1
      %p86 = por %p84, %p85
      %p88 = scmp.ne.s32.totalorder %s73, %s87
      %p89 = scmp.eq.s32.totalorder %s21, 0
      %p90 = por %p88, %p89
      %s91 = ssub.s32 %s15, %s22
      %p92 = scmp.eq.s32.totalorder %s91, 0
      %s94 = sadd.s32 %s93, 1
      %s95 = scalar_select %p92, %s93, %s94
      %p98 = pneg %p92
      %p99 = scmp.eq.s32.totalorder %s15, 1
      %p100 = por %p98, %p99
      %p101 = scmp.ne.s32.totalorder %s93, %s96
      %p102 = scmp.eq.s32.totalorder %s15, 0
      %p103 = por %p101, %p102
      %p104 = scmp.ne.s32.totalorder %s93, %s96
      %p105 = scmp.eq.s32.totalorder %s20, 1
      %p106 = por %p104, %p105
      %p107 = scmp.ne.s32.totalorder %s96, %s97
      %p108 = scmp.eq.s32.totalorder %s20, 0
      %p109 = por %p107, %p108
      %p110 = scmp.ne.s32.totalorder %s96, %s97
      %p111 = scmp.eq.s32.totalorder %s21, 1
      %p112 = por %p110, %p111
      %p114 = scmp.ne.s32.totalorder %s97, %s113
      %p115 = scmp.eq.s32.totalorder %s21, 0
      %p116 = por %p114, %p115
      %p117 = scmp.le.s32.totalorder 1, %s15
      %p118 = scmp.lt.s32.totalorder %s15, 3
      %p119 = pnand %p117, %p118
      %p120 = pneg %p119
      // Predicated region
      $region9: #{tpu_custom_call.1} parent=5 // pred_check
        _
      $region10: #{tpu_custom_call.1} parent=5 // pred_check_branch
        %122 = sbr.rel (%p119) target = $region12
      $region11: #{tpu_custom_call.1} parent=5 // pred_region
        %s123 = ssub.s32 %s15, 1
        // Predicated region
        $region13: #{tpu_custom_call.1} parent=11 // pred_check
          %p124 = pneg %p62
        $region14: #{tpu_custom_call.1} parent=11 // pred_check_branch
          %126 = sbr.rel (%p124) target = $region16
        $region15: #{tpu_custom_call.1} parent=11 // pred_region
          _
        $region16: #{tpu_custom_call.1} parent=11 // pred_fallthru
          _
        // Predicated region
        $region17: #{tpu_custom_call.1} parent=11 // pred_check
          %p127 = pneg %p83
        $region18: #{tpu_custom_call.1} parent=11 // pred_check_branch
          %129 = sbr.rel (%p127) target = $region20
        $region19: #{tpu_custom_call.1} parent=11 // pred_region
          _
        $region20: #{tpu_custom_call.1} parent=11 // pred_fallthru
          _
      $region12: #{tpu_custom_call.1} parent=5 // pred_fallthru
        _
      %p130 = scmp.lt.s32.totalorder %s15, 2
      // Predicated region
      $region21: #{tpu_custom_call.1} parent=5 // pred_check
        %p131 = pneg %p130
      $region22: #{tpu_custom_call.1} parent=5 // pred_check_branch
        %133 = sbr.rel (%p131) target = $region24
      $region23: #{tpu_custom_call.1} parent=5 // pred_region
        // Predicated region
        $region25: #{tpu_custom_call.1} parent=23 // pred_check
          %p134 = pneg %p35
        $region26: #{tpu_custom_call.1} parent=23 // pred_check_branch
          %136 = sbr.rel (%p134) target = $region28
        $region27: #{tpu_custom_call.1} parent=23 // pred_region
          %s137 = sand.u32 %s25, 1
          %s138 = scalar_lea.sflag [#allocation3], %s137
          %s139 = sand.u32 %s25, 1
          %s140 = smul.addr %s139, 8
          %s141 = scalar_lea.vmem [#allocation2], %s140
          %s143 = ssub.s32 128, 128
          %144 = vsyncadd %s138, %s143
          %s145 = smul.addr %s15, 128
          %s146 = scalar_lea.hbm %s0, %s145
          %s148 = sshll.u32 %s141, 4
          %s149 = int_to_ptr.vmem [resolvable:$true] %s148
          %151 = dma.hbm_to_vmem [thread:$0]  %s146, 128, %s149, %s138
        $region28: #{tpu_custom_call.1} parent=23 // pred_fallthru
          _
      $region24: #{tpu_custom_call.1} parent=5 // pred_fallthru
        _
      %p152 = scmp.le.s32.totalorder 1, %s15
      %p153 = scmp.lt.s32.totalorder %s15, 3
      %p154 = pnand %p152, %p153
      %p155 = pneg %p154
      // Predicated region
      $region29: #{tpu_custom_call.1} parent=5 // pred_check
        _
      $region30: #{tpu_custom_call.1} parent=5 // pred_check_branch
        %157 = sbr.rel (%p154) target = $region32
      $region31: #{tpu_custom_call.1} parent=5 // pred_region
        %s158 = ssub.s32 %s15, 1
        %s159 = sand.u32 %s28, 1
        %s160 = scalar_lea.sflag [#allocation3], %s159
        %s161 = sand.u32 %s28, 1
        %s162 = smul.addr %s161, 8
        %s163 = scalar_lea.vmem [#allocation2], %s162
        // Predicated region
        $region33: #{tpu_custom_call.1} parent=31 // pred_check
          %p164 = pneg %p41
        $region34: #{tpu_custom_call.1} parent=31 // pred_check_branch
          %166 = sbr.rel (%p164) target = $region36
        $region35: #{tpu_custom_call.1} parent=31 // pred_region
          %167 = dma.done %s160, 128
        $region36: #{tpu_custom_call.1} parent=31 // pred_fallthru
          _
        %s168 = sand.u32 %s28, 1
        %s169 = scalar_lea.sflag [#allocation3], %s168
        %s170 = sand.u32 %s28, 1
        %s171 = smul.addr %s170, 8
        %s172 = scalar_lea.vmem [#allocation2], %s171
        %p173 = pneg %p41
        %p174 = pneg %p38
        %p175 = pneg %p62
        %p176 = pneg %p59
        %p177 = pneg %p83
        %p178 = pneg %p80
        %p179 = pneg %p109
        %p180 = pneg %p106
        %s181 = sand.u32 %s96, 1
        %s182 = scalar_lea.sflag [#allocation4], %s181
        %s183 = sand.u32 %s96, 1
        %s184 = smul.addr %s183, 8
        %s185 = scalar_lea.vmem [#allocation5], %s184
        %v186 = vld [vmem:[%s163] sm:$0xff]
        %187 = vadd.xlane.f32.xlu0 %v186
        %v188 = vpop.xlane.xlu0 %187
        %v189 = vlaneseq
        %v190 = vshrl.u32 %v189, 7
        %v191 = vlaneseq
        %v192 = vand.u32 %v191, 127
        %vm193 = vcmp.eq.s32.totalorder %v190, %v192
        %v194 = vsel %vm193, %v188, 0.0
        %vm195 = vcmask 64512
        %v196 = vsel %vm195, %v194, 0.0
        %v197 = vrot.slane %v196, 4
        %v198 = vadd.f32 %v196, %v197
        %v199 = vrot.slane %v198, 2
        %v200 = vadd.f32 %v198, %v199
        %v201 = vrot.slane %v200, 1
        %v202 = vadd.f32 %v200, %v201
        %v203 = vld [vmem:[%s1] sm:$0xff]
        %v204 = vmul.f32 %v203, %v202
        %v205 = vsel %vm195, %v204, 0.0
        %206 = vadd.xlane.f32.xlu0 %v205
        %v207 = vpop.xlane.xlu0 %206
        %v208 = vld [vmem:[%s2] sm:$0xff]
        %v209 = vadd.f32 %v207, %v208
        %v210 = vxor.u32 %v209, 2147483648
        %v211 = vmul.f32 %v210, 1.442695
        %v212 = vpow.pop %v211
        %v213 = vadd.f32 %v212, 1.0
        %v214 = vrcp.pop %v213
        %v215 = vmul.f32 1.0, %v214
        %217 = vset.pattern.permute.xlu0 0
        %218 = vperm.xlu0 %217, %v215
        %v219 = vpop.permute.xlu0 %218
        %v221 = vmul.f32 %v186, %v219
        %222 = vst [vmem:[%s185] sm:$0xff] %v221
        %s223 = sand.u32 %s96, 1
        %s224 = scalar_lea.sflag [#allocation4], %s223
        %s225 = sand.u32 %s96, 1
        %s226 = smul.addr %s225, 8
        %s227 = scalar_lea.vmem [#allocation5], %s226
        // Predicated region
        $region37: #{tpu_custom_call.1} parent=31 // pred_check
          %p228 = pneg %p106
        $region38: #{tpu_custom_call.1} parent=31 // pred_check_branch
          %230 = sbr.rel (%p228) target = $region40
        $region39: #{tpu_custom_call.1} parent=31 // pred_region
          %s232 = ssub.s32 128, 128
          %233 = vsyncadd %s224, %s232
          %s234 = smul.addr %s20, 128
          %s235 = scalar_lea.hbm %s3, %s234
          %s237 = sshll.u32 %s227, 4
          %s238 = int_to_ptr.vmem [resolvable:$true] %s237
          %240 = dma.vmem_to_hbm [thread:$0]  %s238, 128, %s235, %s224
        $region40: #{tpu_custom_call.1} parent=31 // pred_fallthru
          _
      $region32: #{tpu_custom_call.1} parent=5 // pred_fallthru
        _
      %p241 = scmp.le.s32.totalorder 2, %s15
      // Predicated region
      $region41: #{tpu_custom_call.1} parent=5 // pred_check
        %p242 = pneg %p241
      $region42: #{tpu_custom_call.1} parent=5 // pred_check_branch
        %244 = sbr.rel (%p242) target = $region44
      $region43: #{tpu_custom_call.1} parent=5 // pred_region
        %s245 = ssub.s32 %s15, 2
        // Predicated region
        $region45: #{tpu_custom_call.1} parent=43 // pred_check
          %p246 = pneg %p112
        $region46: #{tpu_custom_call.1} parent=43 // pred_check_branch
          %248 = sbr.rel (%p246) target = $region48
        $region47: #{tpu_custom_call.1} parent=43 // pred_region
          %s249 = sand.u32 %s97, 1
          %s250 = scalar_lea.sflag [#allocation4], %s249
          %s251 = sand.u32 %s97, 1
          %s252 = smul.addr %s251, 8
          %s253 = scalar_lea.vmem [#allocation5], %s252
          %254 = dma.done %s250, 128
        $region48: #{tpu_custom_call.1} parent=43 // pred_fallthru
          _
      $region44: #{tpu_custom_call.1} parent=5 // pred_fallthru
        _
    $region6: #{tpu_custom_call.1} parent=1 // loop_footer
      %s19 = sadd.s32 1, %s15
    $region7: #{tpu_custom_call.1} parent=1 // loop_footer_branch
      %14 = sbr.rel target = $region3
    $region8: #{tpu_custom_call.1} parent=1 // loop_exit
      _
    %255 = vsyncpa [#allocation3], 1
    %s256 = scalar_lea.sflag [#allocation3], 1
    %257 = vsyncpa %s256, 1
    %258 = vsyncpa [#allocation4], 1
    %s259 = scalar_lea.sflag [#allocation4], 1
    %260 = vsyncpa %s259, 1

</llo_original>
